<compile_context>
chip_gen: v7x
topology: tpu7x:2x2x1
jax: 0.10.0
libtpu: 0.0.40
codegen_flags: <defaults>
</compile_context>

<pallas_src>
import functools

import jax
import jax.numpy as jnp
import numpy as np
from jax.experimental import pallas as pl
from jax.experimental.pallas import tpu as pltpu


def _patchify_kernel(x_ref, o_ref):
    # x_ref block: (1, k, p, w, p*C)   o_ref block: (1, k, w, p, p*C)
    # Swap the (p1, w) axes; the lane axis (p*C) is untouched, so this lowers
    # to sublane-level data movement only.
    o_ref[...] = jnp.transpose(x_ref[...], (0, 1, 3, 2, 4))


def _rows_per_step(h, row_bytes, target=512 * 1024, cap=2 * 1024 * 1024):
    """How many patch-rows (of the h axis) to process per grid step.

    Big enough (>= ~512 KiB when possible) to amortize per-step pipeline
    overhead, small enough that 2x double-buffered (in + out) blocks stay
    far below every generation's scoped-VMEM default.
    """
    best = 1
    for d in range(1, h + 1):
        if h % d:
            continue
        if d > 1 and d * row_bytes > cap:
            break
        best = d
        if d * row_bytes >= target:
            break
    return best


@functools.partial(jax.jit, static_argnums=(1,))
def rearrange_layer_forward(img, p):
    """img: (B, C, H, W) with H % p == 0 and W % p == 0. Returns (B, h*w, p*p*C)."""
    B, C, H, W = img.shape
    assert H % p == 0 and W % p == 0
    h, w = H // p, W // p
    pc = p * C

    # One XLA transpose on HBM (would be fused upstream in a real model); the
    # kernel then never moves data across the lane axis.
    x = jnp.transpose(img, (0, 2, 3, 1))          # (B, H, W, C)  NHWC
    x = x.reshape(B, h, p, w, pc)                 # free reshape (contiguous)

    row_bytes = p * W * C * img.dtype.itemsize    # bytes of one patch-row block
    k = _rows_per_step(h, row_bytes)
    grid = (B, h // k)

    out5 = pl.pallas_call(
        _patchify_kernel,
        out_shape=jax.ShapeDtypeStruct((B, h, w, p, pc), img.dtype),
        grid_spec=pl.GridSpec(
            grid=grid,
            in_specs=[pl.BlockSpec((1, k, p, w, pc),
                                   lambda b, i: (b, i, 0, 0, 0))],
            out_specs=pl.BlockSpec((1, k, w, p, pc),
                                   lambda b, i: (b, i, 0, 0, 0)),
        ),
        compiler_params=pltpu.CompilerParams(
            dimension_semantics=("parallel", "parallel"),
        ),
    )(x)

    # Free reshape: (B, h, w, p, p*C) is laid out exactly as (B, h*w, p*p*C)
    # with the einops (p1 p2 c) inner ordering (c fastest).
    return out5.reshape(B, h * w, p * p * C)


def _reference_rearrange(img, p):
    # numpy reference of einops 'b c (h p1) (w p2) -> b (h w) (p1 p2 c)'
    img = np.asarray(img)
    B, C, H, W = img.shape
    h, w = H // p, W // p
    x = img.reshape(B, C, h, p, w, p)             # b c h p1 w p2
    x = x.transpose(0, 2, 4, 3, 5, 1)             # b h w p1 p2 c
    return x.reshape(B, h * w, p * p * C)


if __name__ == "__main__":
    key = jax.random.PRNGKey(0)

    # Small config consistent with the module's forward.
    B, C, H, W = 2, 4, 16, 16
    p = 4
    img = jax.random.normal(key, (B, C, H, W), dtype=jnp.float32)

    out = jax.block_until_ready(rearrange_layer_forward(img, p))
    ref = _reference_rearrange(img, p)
    assert out.shape == ref.shape, (out.shape, ref.shape)
    np.testing.assert_allclose(np.asarray(out), ref, rtol=0, atol=0)

    # A ViT-like shape in bf16 (C=3, p=16) to exercise the relayout-free path
    # at a non-toy, lane-sparse-C configuration (per review note).
    B2, C2, H2, W2, p2 = 2, 3, 128, 128, 16
    img2 = jax.random.normal(jax.random.PRNGKey(1), (B2, C2, H2, W2),
                             dtype=jnp.bfloat16)
    out2 = jax.block_until_ready(rearrange_layer_forward(img2, p2))
    ref2 = _reference_rearrange(img2, p2)
    np.testing.assert_allclose(np.asarray(out2, dtype=np.float32),
                               np.asarray(ref2, dtype=np.float32),
                               rtol=0, atol=0)

    print("KERNEL_OK")
</pallas_src>

<mosaic_0001>
module attributes {stable_mosaic.version = 11 : i64} {
  func.func @_patchify_kernel(%arg0: i32, %arg1: i32, %arg2: memref<1x4x4x4x16xf32, #tpu.memory_space<vmem>>, %arg3: memref<1x4x4x4x16xf32, #tpu.memory_space<vmem>>) attributes {dimension_semantics = [#tpu.dimension_semantics<parallel>, #tpu.dimension_semantics<parallel>], iteration_bounds = array<i64: 2, 1>, scalar_prefetch = 0 : i64, scratch_operands = 0 : i64, tpu.core_type = #tpu.core_type<tc>, window_params = [{transform_indices = @transform_0, window_bounds = array<i64: 1, 4, 4, 4, 16>}, {transform_indices = @transform_1, window_bounds = array<i64: 1, 4, 4, 4, 16>}]} {
    %c0 = arith.constant 0 : index
    %c0_0 = arith.constant 0 : index
    %c0_1 = arith.constant 0 : index
    %c0_2 = arith.constant 0 : index
    %c0_3 = arith.constant 0 : index
    %0 = vector.load %arg2[%c0, %c0_0, %c0_1, %c0_2, %c0_3] : memref<1x4x4x4x16xf32, #tpu.memory_space<vmem>>, vector<1x4x4x4x16xf32>
    %1 = tpu.transpose %0, [0, 1, 3, 2, 4] : vector<1x4x4x4x16xf32> -> vector<1x4x4x4x16xf32>
    %c0_4 = arith.constant 0 : index
    %c0_5 = arith.constant 0 : index
    %c0_6 = arith.constant 0 : index
    %c0_7 = arith.constant 0 : index
    %c0_8 = arith.constant 0 : index
    %2 = vector.load %arg3[%c0_4, %c0_5, %c0_6, %c0_7, %c0_8] : memref<1x4x4x4x16xf32, #tpu.memory_space<vmem>>, vector<1x4x4x4x16xf32>
    tpu.vector_store %arg3[%c0_4, %c0_5, %c0_6, %c0_7, %c0_8], %1 {strides = array<i32>} : memref<1x4x4x4x16xf32, #tpu.memory_space<vmem>>, vector<1x4x4x4x16xf32>,
    return
  }
  func.func @transform_0(%arg0: i32, %arg1: i32) -> (i32, i32, i32, i32, i32) {
    %c0_i32 = arith.constant 0 : i32
    %c0_i32_0 = arith.constant 0 : i32
    %c0_i32_1 = arith.constant 0 : i32
    %c0_i32_2 = arith.constant 0 : i32
    return %arg0, %arg1, %c0_i32, %c0_i32_0, %c0_i32_1 : i32, i32, i32, i32, i32
  }
  func.func @transform_1(%arg0: i32, %arg1: i32) -> (i32, i32, i32, i32, i32) {
    %c0_i32 = arith.constant 0 : i32
    %c0_i32_0 = arith.constant 0 : i32
    %c0_i32_1 = arith.constant 0 : i32
    %c0_i32_2 = arith.constant 0 : i32
    return %arg0, %arg1, %c0_i32, %c0_i32_0, %c0_i32_1 : i32, i32, i32, i32, i32
  }
}

</mosaic_0001>

<llo_original>
// kernel: rearrange_layer_forward.1
$region0: #{rearrange_layer_forward.1}
  #allocation0 [shape = 'u32[]', space=smem, size = 0x4, offset = 0x4, fixed_abs, tag = 'smem constant byte address 0x4 - core index']
  #allocation1 [shape = 'u32[144,128]{1,0:T(1,128)}', space=vmem, size = 0x12000, scoped, tag = 'internal scratch']
  %s0 = inlined_call_operand.vmem [shape: f32[2,4,4,4,16], index: 0, kind: input, shape index: {}]
  %s1 = inlined_call_operand.vmem [shape: f32[2,4,4,4,16], index: 1, kind: output, shape index: {}]
  %s2 = sld [smem:[#allocation0]]
  $region37: #{rearrange_layer_forward.1} parent=0
    _
  %s4 = ssub.s32 1, %s2
  %s5 = scalar_select 0, %s4, %s2
  loop: start=0, step=1, limit=4
  $region2: #{rearrange_layer_forward.1} parent=0 // loop_pre_header
    _
  $region3: #{rearrange_layer_forward.1} parent=0 // loop_header
    %s7 = sphi 0, %s11
    %p8 = scmp.ge.s32.totalorder %s7, 4
    %s14 = sphi 0, %s26
    %s15 = sphi 0, %s22
    %s16 = sphi 0, %s14
    %s17 = sphi 0, %s15
    %s18 = sphi 0, %s16
    %s19 = sphi 0, %s17
    %s31 = sphi 0, %s33
    %s34 = sphi 0, %s31
    %s35 = sphi 0, %s34
    %s51 = sphi 0, %s35
    %s59 = sphi 0, %s61
    %s62 = sphi 0, %s59
    %s63 = sphi 0, %s62
    %s79 = sphi 0, %s63
  $region4: #{rearrange_layer_forward.1} parent=0 // loop_header_branch
    %10 = sbr.rel (%p8) target = $region8
  $region5: #{rearrange_layer_forward.1} parent=0 // loop_body
    %s12 = ssub.s32 %s7, 1
    %s13 = ssub.s32 %s7, 2
    %s20 = sadd.s32 1, %s15
    %p21 = scmp.ge.s32.totalorder %s20, 1
    %s22 = scalar_select %p21, 0, %s20
    %s23 = sadd.s32 1, %s14
    %s24 = scalar_select %p21, %s23, %s14
    %p25 = scmp.ge.s32.totalorder %s24, 2
    %s26 = scalar_select %p25, 0, %s24
    %s27 = ssub.s32 %s14, %s26
    %s28 = ssub.s32 %s15, %s22
    %s29 = sor.u32 %s27, %s28
    %p30 = scmp.eq.s32.totalorder %s29, 0
    %s32 = sadd.s32 %s31, 1
    %s33 = scalar_select %p30, %s31, %s32
    %p36 = pneg %p30
    %p37 = scmp.eq.s32.totalorder %s7, 1
    %p38 = por %p36, %p37
    %p39 = scmp.ne.s32.totalorder %s31, %s34
    %p40 = scmp.eq.s32.totalorder %s7, 0
    %p41 = por %p39, %p40
    %p42 = scmp.ne.s32.totalorder %s31, %s34
    %p43 = scmp.eq.s32.totalorder %s12, 1
    %p44 = por %p42, %p43
    %p45 = scmp.ne.s32.totalorder %s34, %s35
    %p46 = scmp.eq.s32.totalorder %s12, 0
    %p47 = por %p45, %p46
    %p48 = scmp.ne.s32.totalorder %s34, %s35
    %p49 = scmp.eq.s32.totalorder %s13, 1
    %p50 = por %p48, %p49
    %p52 = scmp.ne.s32.totalorder %s35, %s51
    %p53 = scmp.eq.s32.totalorder %s13, 0
    %p54 = por %p52, %p53
    %s55 = ssub.s32 %s14, %s26
    %s56 = ssub.s32 %s15, %s22
    %s57 = sor.u32 %s55, %s56
    %p58 = scmp.eq.s32.totalorder %s57, 0
    %s60 = sadd.s32 %s59, 1
    %s61 = scalar_select %p58, %s59, %s60
    %p64 = pneg %p58
    %p65 = scmp.eq.s32.totalorder %s7, 1
    %p66 = por %p64, %p65
    %p67 = scmp.ne.s32.totalorder %s59, %s62
    %p68 = scmp.eq.s32.totalorder %s7, 0
    %p69 = por %p67, %p68
    %p70 = scmp.ne.s32.totalorder %s59, %s62
    %p71 = scmp.eq.s32.totalorder %s12, 1
    %p72 = por %p70, %p71
    %p73 = scmp.ne.s32.totalorder %s62, %s63
    %p74 = scmp.eq.s32.totalorder %s12, 0
    %p75 = por %p73, %p74
    %p76 = scmp.ne.s32.totalorder %s62, %s63
    %p77 = scmp.eq.s32.totalorder %s13, 1
    %p78 = por %p76, %p77
    %p80 = scmp.ne.s32.totalorder %s63, %s79
    %p81 = scmp.eq.s32.totalorder %s13, 0
    %p82 = por %p80, %p81
    %p83 = scmp.le.s32.totalorder 1, %s7
    %p84 = scmp.lt.s32.totalorder %s7, 3
    %p85 = pnand %p83, %p84
    %p86 = pneg %p85
    // Predicated region
    $region9: #{rearrange_layer_forward.1} parent=5 // pred_check
      _
    $region10: #{rearrange_layer_forward.1} parent=5 // pred_check_branch
      %88 = sbr.rel (%p85) target = $region12
    $region11: #{rearrange_layer_forward.1} parent=5 // pred_region
      %s89 = ssub.s32 %s7, 1
    $region12: #{rearrange_layer_forward.1} parent=5 // pred_fallthru
      _
    %p90 = scmp.lt.s32.totalorder %s7, 2
    // Predicated region
    $region13: #{rearrange_layer_forward.1} parent=5 // pred_check
      %p91 = pneg %p90
    $region14: #{rearrange_layer_forward.1} parent=5 // pred_check_branch
      %93 = sbr.rel (%p91) target = $region16
    $region15: #{rearrange_layer_forward.1} parent=5 // pred_region
      // Predicated region
      $region17: #{rearrange_layer_forward.1} parent=15 // pred_check
        %p94 = pneg %p41
      $region18: #{rearrange_layer_forward.1} parent=15 // pred_check_branch
        %96 = sbr.rel (%p94) target = $region20
      $region19: #{rearrange_layer_forward.1} parent=15 // pred_region
        %s97 = smul.u32 4, %s15
        %p98 = scmp.lt.s32.totalorder %s14, 1
        %s99 = scalar_select %p98, %s14, 1
        %p100 = scmp.lt.s32.totalorder %s97, 3
        %s101 = scalar_select %p100, %s97, 3
        %s102 = smul.addr %s101, 4
        %s103 = smul.addr %s99, 16
        %s104 = sadd.s32 %s102, %s103
        %s105 = smul.addr %s104, 4
        %s106 = scalar_lea.vmem %s0, %s105
        %s107 = smul.u32 4, %s15
      $region20: #{rearrange_layer_forward.1} parent=15 // pred_fallthru
        _
    $region16: #{rearrange_layer_forward.1} parent=5 // pred_fallthru
      _
    %p108 = scmp.le.s32.totalorder 1, %s7
    %p109 = scmp.lt.s32.totalorder %s7, 3
    %p110 = pnand %p108, %p109
    %p111 = pneg %p110
    // Predicated region
    $region21: #{rearrange_layer_forward.1} parent=5 // pred_check
      _
    $region22: #{rearrange_layer_forward.1} parent=5 // pred_check_branch
      %113 = sbr.rel (%p110) target = $region24
    $region23: #{rearrange_layer_forward.1} parent=5 // pred_region
      %s114 = ssub.s32 %s7, 1
      %s115 = smul.u32 4, %s17
      %p116 = scmp.lt.s32.totalorder %s16, 1
      %s117 = scalar_select %p116, %s16, 1
      %p118 = scmp.lt.s32.totalorder %s115, 3
      %s119 = scalar_select %p118, %s115, 3
      %s120 = smul.addr %s119, 4
      %s121 = smul.addr %s117, 16
      %s122 = sadd.s32 %s120, %s121
      %s123 = smul.addr %s122, 4
      %s124 = scalar_lea.vmem %s0, %s123
      %p125 = pneg %p47
      %p126 = pneg %p44
      %p127 = pneg %p75
      %p128 = pneg %p72
      %s129 = smul.u32 4, %s17
      %p130 = scmp.lt.s32.totalorder %s16, 1
      %s131 = scalar_select %p130, %s16, 1
      %p132 = scmp.lt.s32.totalorder %s129, 3
      %s133 = scalar_select %p132, %s129, 3
      %s134 = smul.addr %s133, 4
      %s135 = smul.addr %s131, 16
      %s136 = sadd.s32 %s134, %s135
      %s137 = smul.addr %s136, 4
      %s138 = scalar_lea.vmem %s1, %s137
      %s139 = smul.u32 4, %s17
      %p140 = scmp.lt.s32.totalorder %s16, 1
      %s141 = scalar_select %p140, %s16, 1
      %p142 = scmp.lt.s32.totalorder %s139, 3
      %s143 = scalar_select %p142, %s139, 3
      %s144 = smul.addr %s143, 4
      %s145 = smul.addr %s141, 16
      %s146 = sadd.s32 %s144, %s145
      %s147 = smul.addr %s146, 4
      %s148 = scalar_lea.vmem %s0, %s147
      %s149 = smul.u32 4, %s17
      %s150 = smul.u32 4, %s17
      %p151 = scmp.lt.s32.totalorder %s16, 1
      %s152 = scalar_select %p151, %s16, 1
      %p153 = scmp.lt.s32.totalorder %s150, 3
      %s154 = scalar_select %p153, %s150, 3
      %s155 = smul.addr %s154, 4
      %s156 = smul.addr %s152, 16
      %s157 = sadd.s32 %s155, %s156
      %s158 = smul.addr %s157, 4
      %s159 = scalar_lea.vmem %s1, %s158
      %s160 = smul.u32 4, %s17
      %v161 = vld [vmem:[%s148] sm:$0xf]
      %v162 = vld [vmem:[%s148 + $0x4] sm:$0xf]
      %v163 = vld [vmem:[%s148 + $0x8] sm:$0xf]
      %v164 = vld [vmem:[%s148 + $0xc] sm:$0xf]
      %v165 = vld [vmem:[%s148 + $0x10] sm:$0xf]
      %v166 = vld [vmem:[%s148 + $0x14] sm:$0xf]
      %v167 = vld [vmem:[%s148 + $0x18] sm:$0xf]
      %v168 = vld [vmem:[%s148 + $0x1c] sm:$0xf]
      %v169 = vld [vmem:[%s148 + $0x20] sm:$0xf]
      %v170 = vld [vmem:[%s148 + $0x24] sm:$0xf]
      %v171 = vld [vmem:[%s148 + $0x28] sm:$0xf]
      %v172 = vld [vmem:[%s148 + $0x2c] sm:$0xf]
      %v173 = vld [vmem:[%s148 + $0x30] sm:$0xf]
      %v174 = vld [vmem:[%s148 + $0x34] sm:$0xf]
      %v175 = vld [vmem:[%s148 + $0x38] sm:$0xf]
      %v176 = vld [vmem:[%s148 + $0x3c] sm:$0xf]
      %v177 = vcombine.low %v161, %v163
      %v179 = vunpack.c.l.s4 1983009808
      %v180 = vunpack.c.0.s8 %v179
      %v181 = vlaneseq
      %v182 = vshrl.u32 %v181, 7
      %v183 = vsub.s32 %v180, %v182
      %v184 = vrot.slane %v177, %v183
      %v185 = vcombine.low %v162, %v164
      %v187 = vunpack.c.l.s4 1983009808
      %v188 = vunpack.c.0.s8 %v187
      %v189 = vlaneseq
      %v190 = vshrl.u32 %v189, 7
      %v191 = vsub.s32 %v188, %v190
      %v192 = vrot.slane %v185, %v191
      %v193 = vcombine.low %v184, %v192
      %v194 = vcombine.high %v184, %v192
      %v196 = vunpack.c.l.s4 1934713408
      %v197 = vunpack.c.0.s8 %v196
      %v198 = vlaneseq
      %v199 = vshrl.u32 %v198, 7
      %v200 = vsub.s32 %v197, %v199
      %v201 = vrot.slane %v193, %v200
      %v203 = vunpack.c.l.s4 1934713408
      %v204 = vunpack.c.0.s8 %v203
      %v205 = vlaneseq
      %v206 = vshrl.u32 %v205, 7
      %v207 = vsub.s32 %v204, %v206
      %v208 = vrot.slane %v194, %v207
      %v209 = vcombine.high %v201, 0.0
      %v210 = vcombine.high %v208, 0.0
      %v211 = vcombine.low %v165, %v167
      %v213 = vunpack.c.l.s4 1983009808
      %v214 = vunpack.c.0.s8 %v213
      %v215 = vlaneseq
      %v216 = vshrl.u32 %v215, 7
      %v217 = vsub.s32 %v214, %v216
      %v218 = vrot.slane %v211, %v217
      %v219 = vcombine.low %v166, %v168
      %v221 = vunpack.c.l.s4 1983009808
      %v222 = vunpack.c.0.s8 %v221
      %v223 = vlaneseq
      %v224 = vshrl.u32 %v223, 7
      %v225 = vsub.s32 %v222, %v224
      %v226 = vrot.slane %v219, %v225
      %v227 = vcombine.low %v218, %v226
      %v228 = vcombine.high %v218, %v226
      %v230 = vunpack.c.l.s4 1934713408
      %v231 = vunpack.c.0.s8 %v230
      %v232 = vlaneseq
      %v233 = vshrl.u32 %v232, 7
      %v234 = vsub.s32 %v231, %v233
      %v235 = vrot.slane %v227, %v234
      %v237 = vunpack.c.l.s4 1934713408
      %v238 = vunpack.c.0.s8 %v237
      %v239 = vlaneseq
      %v240 = vshrl.u32 %v239, 7
      %v241 = vsub.s32 %v238, %v240
      %v242 = vrot.slane %v228, %v241
      %v243 = vcombine.high %v235, 0.0
      %v244 = vcombine.high %v242, 0.0
      %v245 = vcombine.low %v169, %v171
      %v247 = vunpack.c.l.s4 1983009808
      %v248 = vunpack.c.0.s8 %v247
      %v249 = vlaneseq
      %v250 = vshrl.u32 %v249, 7
      %v251 = vsub.s32 %v248, %v250
      %v252 = vrot.slane %v245, %v251
      %v253 = vcombine.low %v170, %v172
      %v255 = vunpack.c.l.s4 1983009808
      %v256 = vunpack.c.0.s8 %v255
      %v257 = vlaneseq
      %v258 = vshrl.u32 %v257, 7
      %v259 = vsub.s32 %v256, %v258
      %v260 = vrot.slane %v253, %v259
      %v261 = vcombine.low %v252, %v260
      %v262 = vcombine.high %v252, %v260
      %v264 = vunpack.c.l.s4 1934713408
      %v265 = vunpack.c.0.s8 %v264
      %v266 = vlaneseq
      %v267 = vshrl.u32 %v266, 7
      %v268 = vsub.s32 %v265, %v267
      %v269 = vrot.slane %v261, %v268
      %v271 = vunpack.c.l.s4 1934713408
      %v272 = vunpack.c.0.s8 %v271
      %v273 = vlaneseq
      %v274 = vshrl.u32 %v273, 7
      %v275 = vsub.s32 %v272, %v274
      %v276 = vrot.slane %v262, %v275
      %v277 = vcombine.high %v269, 0.0
      %v278 = vcombine.high %v276, 0.0
      %v279 = vcombine.low %v173, %v175
      %v281 = vunpack.c.l.s4 1983009808
      %v282 = vunpack.c.0.s8 %v281
      %v283 = vlaneseq
      %v284 = vshrl.u32 %v283, 7
      %v285 = vsub.s32 %v282, %v284
      %v286 = vrot.slane %v279, %v285
      %v287 = vcombine.low %v174, %v176
      %v289 = vunpack.c.l.s4 1983009808
      %v290 = vunpack.c.0.s8 %v289
      %v291 = vlaneseq
      %v292 = vshrl.u32 %v291, 7
      %v293 = vsub.s32 %v290, %v292
      %v294 = vrot.slane %v287, %v293
      %v295 = vcombine.low %v286, %v294
      %v296 = vcombine.high %v286, %v294
      %v298 = vunpack.c.l.s4 1934713408
      %v299 = vunpack.c.0.s8 %v298
      %v300 = vlaneseq
      %v301 = vshrl.u32 %v300, 7
      %v302 = vsub.s32 %v299, %v301
      %v303 = vrot.slane %v295, %v302
      %v305 = vunpack.c.l.s4 1934713408
      %v306 = vunpack.c.0.s8 %v305
      %v307 = vlaneseq
      %v308 = vshrl.u32 %v307, 7
      %v309 = vsub.s32 %v306, %v308
      %v310 = vrot.slane %v296, %v309
      %v311 = vcombine.high %v303, 0.0
      %v312 = vcombine.high %v310, 0.0
      %vm313 = vcmask 125952
      %314 = vst.msk [vmem:[%s159] sm:$0xf] %vm313, %v201
      %315 = vst.msk [vmem:[%s159 + $0x4] sm:$0xf] %vm313, %v209
      %316 = vst.msk [vmem:[%s159 + $0x8] sm:$0xf] %vm313, %v208
      %317 = vst.msk [vmem:[%s159 + $0xc] sm:$0xf] %vm313, %v210
      %318 = vst.msk [vmem:[%s159 + $0x10] sm:$0xf] %vm313, %v235
      %319 = vst.msk [vmem:[%s159 + $0x14] sm:$0xf] %vm313, %v243
      %320 = vst.msk [vmem:[%s159 + $0x18] sm:$0xf] %vm313, %v242
      %321 = vst.msk [vmem:[%s159 + $0x1c] sm:$0xf] %vm313, %v244
      %322 = vst.msk [vmem:[%s159 + $0x20] sm:$0xf] %vm313, %v269
      %323 = vst.msk [vmem:[%s159 + $0x24] sm:$0xf] %vm313, %v277
      %324 = vst.msk [vmem:[%s159 + $0x28] sm:$0xf] %vm313, %v276
      %325 = vst.msk [vmem:[%s159 + $0x2c] sm:$0xf] %vm313, %v278
      %326 = vst.msk [vmem:[%s159 + $0x30] sm:$0xf] %vm313, %v303
      %327 = vst.msk [vmem:[%s159 + $0x34] sm:$0xf] %vm313, %v311
      %328 = vst.msk [vmem:[%s159 + $0x38] sm:$0xf] %vm313, %v310
      %329 = vst.msk [vmem:[%s159 + $0x3c] sm:$0xf] %vm313, %v312
      %s330 = smul.u32 4, %s17
      %p331 = scmp.lt.s32.totalorder %s16, 1
      %s332 = scalar_select %p331, %s16, 1
      %p333 = scmp.lt.s32.totalorder %s330, 3
      %s334 = scalar_select %p333, %s330, 3
      %s335 = smul.addr %s334, 4
      %s336 = smul.addr %s332, 16
      %s337 = sadd.s32 %s335, %s336
      %s338 = smul.addr %s337, 4
      %s339 = scalar_lea.vmem %s1, %s338
      // Predicated region
      $region25: #{rearrange_layer_forward.1} parent=23 // pred_check
        %p340 = pneg %p72
      $region26: #{rearrange_layer_forward.1} parent=23 // pred_check_branch
        %342 = sbr.rel (%p340) target = $region28
      $region27: #{rearrange_layer_forward.1} parent=23 // pred_region
        %s343 = smul.u32 4, %s17
      $region28: #{rearrange_layer_forward.1} parent=23 // pred_fallthru
        _
    $region24: #{rearrange_layer_forward.1} parent=5 // pred_fallthru
      _
    %p344 = scmp.le.s32.totalorder 2, %s7
    // Predicated region
    $region29: #{rearrange_layer_forward.1} parent=5 // pred_check
      %p345 = pneg %p344
    $region30: #{rearrange_layer_forward.1} parent=5 // pred_check_branch
      %347 = sbr.rel (%p345) target = $region32
    $region31: #{rearrange_layer_forward.1} parent=5 // pred_region
      %s348 = ssub.s32 %s7, 2
      // Predicated region
      $region33: #{rearrange_layer_forward.1} parent=31 // pred_check
        %p349 = pneg %p78
      $region34: #{rearrange_layer_forward.1} parent=31 // pred_check_branch
        %351 = sbr.rel (%p349) target = $region36
      $region35: #{rearrange_layer_forward.1} parent=31 // pred_region
        %s352 = smul.u32 4, %s19
        %p353 = scmp.lt.s32.totalorder %s18, 1
        %s354 = scalar_select %p353, %s18, 1
        %p355 = scmp.lt.s32.totalorder %s352, 3
        %s356 = scalar_select %p355, %s352, 3
        %s357 = smul.addr %s356, 4
        %s358 = smul.addr %s354, 16
        %s359 = sadd.s32 %s357, %s358
        %s360 = smul.addr %s359, 4
        %s361 = scalar_lea.vmem %s1, %s360
      $region36: #{rearrange_layer_forward.1} parent=31 // pred_fallthru
        _
    $region32: #{rearrange_layer_forward.1} parent=5 // pred_fallthru
      _
  $region6: #{rearrange_layer_forward.1} parent=0 // loop_footer
    %s11 = sadd.s32 1, %s7
  $region7: #{rearrange_layer_forward.1} parent=0 // loop_footer_branch
    %6 = sbr.rel target = $region3
  $region8: #{rearrange_layer_forward.1} parent=0 // loop_exit
    _

</llo_original>
